<compile_context>
chip_gen: v6e
topology: v6e:2x2x1
jax: 0.10.0
libtpu: 0.0.40
codegen_flags: <defaults>
</compile_context>

<pallas_src>
import math

import jax
import jax.numpy as jnp
from jax.experimental import pallas as pl
from jax.experimental.pallas import tpu as pltpu

EMBED = 64
HIDDEN = 128
NMIX = 5
OUT = NMIX * 6          # 30
OUT_PAD = 128           # lane-dense padded output width


def _lstm1l_seq_kernel(x_ref, h0_ref, c0_ref,
                       w_emb_ref, b_emb_ref,
                       w_ih_ref, w_hh_ref, b_lstm_ref,
                       w_out_ref, b_out_ref,
                       out_ref, h_ref, c_ref):
    t = pl.program_id(1)

    # First time step of this batch tile: load the initial state into the
    # VMEM-resident output blocks (they carry the recurrence across t).
    @pl.when(t == 0)
    def _():
        h_ref[...] = h0_ref[...]
        c_ref[...] = c0_ref[...]

    x = x_ref[...]          # (bn, 2)
    h = h_ref[...]          # (bn, HIDDEN)
    c = c_ref[...]          # (bn, HIDDEN)

    # Embedding + ReLU on the VPU: the contraction dim is only 2, so two
    # broadcast-FMAs replace a mostly-zero MXU matmul.
    emb = (x[:, 0:1] * w_emb_ref[0:1, :]
           + x[:, 1:2] * w_emb_ref[1:2, :]
           + b_emb_ref[...])
    emb = jnp.maximum(emb, 0.0)                                  # (bn, EMBED)

    # LSTM gates: emb @ W_ih^T + h @ W_hh^T + (b_ih + b_hh)
    gates = (jnp.dot(emb, w_ih_ref[...], preferred_element_type=jnp.float32)
             + jnp.dot(h, w_hh_ref[...], preferred_element_type=jnp.float32)
             + b_lstm_ref[...])                                  # (bn, 4*HIDDEN)

    # PyTorch gate order: input, forget, cell(g), output (128-lane-aligned slices)
    i_g = jax.nn.sigmoid(gates[:, 0 * HIDDEN:1 * HIDDEN])
    f_g = jax.nn.sigmoid(gates[:, 1 * HIDDEN:2 * HIDDEN])
    g_g = jnp.tanh(gates[:, 2 * HIDDEN:3 * HIDDEN])
    o_g = jax.nn.sigmoid(gates[:, 3 * HIDDEN:4 * HIDDEN])

    c_new = f_g * c + i_g * g_g
    h_new = o_g * jnp.tanh(c_new)

    # Output projection, lane-dense (HIDDEN -> OUT_PAD = 128).
    out_ref[...] = (jnp.dot(h_new, w_out_ref[...], preferred_element_type=jnp.float32)
                    + b_out_ref[...])

    # Carry state to the next time step (HBM writeback only at block change / grid end).
    h_ref[...] = h_new
    c_ref[...] = c_new


def prepare_params(params):
    """One-time weight preparation (hoisted out of the per-call path)."""
    return {
        "w_emb": jnp.asarray(params["w_emb"], jnp.float32).T,                  # (2, EMBED)
        "b_emb": jnp.asarray(params["b_emb"], jnp.float32).reshape(1, EMBED),
        "w_ih": jnp.asarray(params["w_ih"], jnp.float32).T,                    # (EMBED, 4H)
        "w_hh": jnp.asarray(params["w_hh"], jnp.float32).T,                    # (HIDDEN, 4H)
        "b_lstm": (jnp.asarray(params["b_ih"], jnp.float32)
                   + jnp.asarray(params["b_hh"], jnp.float32)).reshape(1, 4 * HIDDEN),
        "w_out": jnp.zeros((HIDDEN, OUT_PAD), jnp.float32)
                    .at[:, :OUT].set(jnp.asarray(params["w_out"], jnp.float32).T),
        "b_out": jnp.zeros((1, OUT_PAD), jnp.float32)
                    .at[:, :OUT].set(jnp.asarray(params["b_out"], jnp.float32)),
    }


@jax.jit
def lstm1l_rollout(x_seq, h0, c0, prep):
    """x_seq: (T, N, 2); h0, c0: (N, HIDDEN).

    Returns (out_seq (T, N, OUT_PAD), h_T, c_T). Weights stay VMEM-resident and
    h/c stay on-chip across all T steps inside one pallas_call.
    """
    T, N, _ = x_seq.shape
    bn = 128 if (N % 128 == 0) else N        # batch tile; parallel axis for v7x megacore
    nb = N // bn
    grid = (nb, T)                           # recurrence axis last ("arbitrary")

    def wspec(shape):                        # weight: fetched once, resident across grid
        return pl.BlockSpec(shape, lambda b, t: (0, 0))

    out_seq, h_t, c_t = pl.pallas_call(
        _lstm1l_seq_kernel,
        grid=grid,
        in_specs=[
            pl.BlockSpec((None, bn, 2), lambda b, t: (t, b, 0)),        # x_t
            pl.BlockSpec((bn, HIDDEN), lambda b, t: (b, 0)),            # h0
            pl.BlockSpec((bn, HIDDEN), lambda b, t: (b, 0)),            # c0
            wspec((2, EMBED)),                                          # w_emb^T
            wspec((1, EMBED)),                                          # b_emb
            wspec((EMBED, 4 * HIDDEN)),                                 # w_ih^T
            wspec((HIDDEN, 4 * HIDDEN)),                                # w_hh^T
            wspec((1, 4 * HIDDEN)),                                     # b_ih + b_hh
            wspec((HIDDEN, OUT_PAD)),                                   # w_out^T (padded)
            wspec((1, OUT_PAD)),                                        # b_out (padded)
        ],
        out_specs=(
            pl.BlockSpec((None, bn, OUT_PAD), lambda b, t: (t, b, 0)),  # per-step output
            pl.BlockSpec((bn, HIDDEN), lambda b, t: (b, 0)),            # h state (resident over t)
            pl.BlockSpec((bn, HIDDEN), lambda b, t: (b, 0)),            # c state (resident over t)
        ),
        out_shape=(jax.ShapeDtypeStruct((T, N, OUT_PAD), jnp.float32),
                   jax.ShapeDtypeStruct((N, HIDDEN), jnp.float32),
                   jax.ShapeDtypeStruct((N, HIDDEN), jnp.float32)),
        input_output_aliases={1: 1, 2: 2},     # h0 -> h_T, c0 -> c_T (in-place state)
        compiler_params=pltpu.CompilerParams(
            dimension_semantics=("parallel", "arbitrary")),
    )(x_seq, h0, c0,
      prep["w_emb"], prep["b_emb"], prep["w_ih"], prep["w_hh"], prep["b_lstm"],
      prep["w_out"], prep["b_out"])
    return out_seq, h_t, c_t


def model_lstm_1l_forward(xoff, h0, c0, prep):
    """Single LSTM time step, matching Model_LSTM_1L.forward (predict_distance=True)."""
    out_seq, h1, c1 = lstm1l_rollout(xoff[None], h0, c0, prep)
    out = out_seq[0, :, :OUT]                 # drop the lane padding before the split
    mu1 = out[:, 0 * NMIX:1 * NMIX]
    mu2 = out[:, 1 * NMIX:2 * NMIX]
    log_sigma1 = out[:, 2 * NMIX:3 * NMIX]
    log_sigma2 = out[:, 3 * NMIX:4 * NMIX]
    rho = out[:, 4 * NMIX:5 * NMIX]
    pi_logits = out[:, 5 * NMIX:6 * NMIX]
    return (mu1, mu2, log_sigma1, log_sigma2, rho, pi_logits), (h1, c1)


def _reference_forward(x, h0, c0, p):
    emb = jnp.maximum(x @ p["w_emb"].T + p["b_emb"], 0.0)
    gates = emb @ p["w_ih"].T + p["b_ih"] + h0 @ p["w_hh"].T + p["b_hh"]
    i = jax.nn.sigmoid(gates[:, 0 * HIDDEN:1 * HIDDEN])
    f = jax.nn.sigmoid(gates[:, 1 * HIDDEN:2 * HIDDEN])
    g = jnp.tanh(gates[:, 2 * HIDDEN:3 * HIDDEN])
    o = jax.nn.sigmoid(gates[:, 3 * HIDDEN:4 * HIDDEN])
    c_new = f * c0 + i * g
    h_new = o * jnp.tanh(c_new)
    out = h_new @ p["w_out"].T + p["b_out"]
    return out, h_new, c_new


def _init_params(key):
    ks = jax.random.split(key, 8)

    def u(k, shape, fan_in):
        bound = 1.0 / math.sqrt(fan_in)
        return jax.random.uniform(k, shape, jnp.float32, -bound, bound)

    return {
        "w_emb": u(ks[0], (EMBED, 2), 2),
        "b_emb": u(ks[1], (EMBED,), 2),
        "w_ih": u(ks[2], (4 * HIDDEN, EMBED), HIDDEN),
        "w_hh": u(ks[3], (4 * HIDDEN, HIDDEN), HIDDEN),
        "b_ih": u(ks[4], (4 * HIDDEN,), HIDDEN),
        "b_hh": u(ks[5], (4 * HIDDEN,), HIDDEN),
        "w_out": u(ks[6], (OUT, HIDDEN), HIDDEN),
        "b_out": u(ks[7], (OUT,), HIDDEN),
    }


if __name__ == "__main__":
    key = jax.random.PRNGKey(0)
    k_p, k_x, k_h, k_c = jax.random.split(key, 4)

    N = 8  # pedestrians in the frame (batch of the single LSTM time step)
    raw_params = _init_params(k_p)
    prep = prepare_params(raw_params)       # one-time weight prep, hoisted

    xoff = jax.random.normal(k_x, (N, 2), jnp.float32)
    h0 = jax.random.normal(k_h, (N, HIDDEN), jnp.float32) * 0.1
    c0 = jax.random.normal(k_c, (N, HIDDEN), jnp.float32) * 0.1

    # --- module-equivalent single step ---
    (mu1, mu2, ls1, ls2, rho, pi_logits), (h1, c1) = model_lstm_1l_forward(xoff, h0, c0, prep)
    jax.block_until_ready((mu1, mu2, ls1, ls2, rho, pi_logits, h1, c1))

    ref_out, ref_h, ref_c = _reference_forward(xoff, h0, c0, raw_params)
    got_out = jnp.concatenate([mu1, mu2, ls1, ls2, rho, pi_logits], axis=1)
    assert jnp.allclose(got_out, ref_out, atol=1e-4, rtol=1e-4)
    assert jnp.allclose(h1, ref_h, atol=1e-4, rtol=1e-4)
    assert jnp.allclose(c1, ref_c, atol=1e-4, rtol=1e-4)

    # --- multi-step rollout path (weights/state resident in VMEM across T) ---
    T = 4
    xs = jax.random.normal(jax.random.PRNGKey(1), (T, N, 2), jnp.float32)
    out_seq, hT, cT = lstm1l_rollout(xs, h0, c0, prep)
    jax.block_until_ready((out_seq, hT, cT))

    h_r, c_r = h0, c0
    for t in range(T):
        o_r, h_r, c_r = _reference_forward(xs[t], h_r, c_r, raw_params)
        assert jnp.allclose(out_seq[t, :, :OUT], o_r, atol=1e-4, rtol=1e-4)
    assert jnp.allclose(hT, h_r, atol=1e-4, rtol=1e-4)
    assert jnp.allclose(cT, c_r, atol=1e-4, rtol=1e-4)

    print("KERNEL_OK")
</pallas_src>

<mosaic_0001>
module attributes {stable_mosaic.version = 11 : i64} {
  func.func @_lstm1l_seq_kernel(%arg0: i32, %arg1: i32, %arg2: memref<1x8x2xf32, #tpu.memory_space<vmem>>, %arg3: memref<8x128xf32, #tpu.memory_space<vmem>>, %arg4: memref<8x128xf32, #tpu.memory_space<vmem>>, %arg5: memref<2x64xf32, #tpu.memory_space<vmem>>, %arg6: memref<1x64xf32, #tpu.memory_space<vmem>>, %arg7: memref<64x512xf32, #tpu.memory_space<vmem>>, %arg8: memref<128x512xf32, #tpu.memory_space<vmem>>, %arg9: memref<1x512xf32, #tpu.memory_space<vmem>>, %arg10: memref<128x128xf32, #tpu.memory_space<vmem>>, %arg11: memref<1x128xf32, #tpu.memory_space<vmem>>, %arg12: memref<1x8x128xf32, #tpu.memory_space<vmem>>, %arg13: memref<8x128xf32, #tpu.memory_space<vmem>>, %arg14: memref<8x128xf32, #tpu.memory_space<vmem>>) attributes {dimension_semantics = [#tpu.dimension_semantics<parallel>, #tpu.dimension_semantics<arbitrary>], iteration_bounds = array<i64: 1, 1>, scalar_prefetch = 0 : i64, scratch_operands = 0 : i64, tpu.core_type = #tpu.core_type<tc>, window_params = [{transform_indices = @transform_0, window_bounds = array<i64: 1, 8, 2>}, {transform_indices = @transform_1, window_bounds = array<i64: 8, 128>}, {transform_indices = @transform_2, window_bounds = array<i64: 8, 128>}, {pipeline_mode = #tpu.pipeline_mode<synchronous>, transform_indices = @transform_3, window_bounds = array<i64: 2, 64>}, {pipeline_mode = #tpu.pipeline_mode<synchronous>, transform_indices = @transform_4, window_bounds = array<i64: 1, 64>}, {pipeline_mode = #tpu.pipeline_mode<synchronous>, transform_indices = @transform_5, window_bounds = array<i64: 64, 512>}, {pipeline_mode = #tpu.pipeline_mode<synchronous>, transform_indices = @transform_6, window_bounds = array<i64: 128, 512>}, {pipeline_mode = #tpu.pipeline_mode<synchronous>, transform_indices = @transform_7, window_bounds = array<i64: 1, 512>}, {pipeline_mode = #tpu.pipeline_mode<synchronous>, transform_indices = @transform_8, window_bounds = array<i64: 128, 128>}, {pipeline_mode = #tpu.pipeline_mode<synchronous>, transform_indices = @transform_9, window_bounds = array<i64: 1, 128>}, {transform_indices = @transform_10, window_bounds = array<i64: 1, 8, 128>}, {transform_indices = @transform_11, window_bounds = array<i64: 8, 128>}, {transform_indices = @transform_12, window_bounds = array<i64: 8, 128>}]} {
    %c0_i32 = arith.constant 0 : i32
    %0 = arith.cmpi eq, %arg1, %c0_i32 : i32
    %1 = arith.extui %0 : i1 to i32
    %c0_i32_0 = arith.constant 0 : i32
    %2 = arith.cmpi ne, %1, %c0_i32_0 : i32
    scf.if %2 {
      %c0_35 = arith.constant 0 : index
      %c0_36 = arith.constant 0 : index
      %66 = vector.load %arg3[%c0_35, %c0_36] : memref<8x128xf32, #tpu.memory_space<vmem>>, vector<8x128xf32>
      %c0_37 = arith.constant 0 : index
      %c0_38 = arith.constant 0 : index
      %67 = vector.load %arg13[%c0_37, %c0_38] : memref<8x128xf32, #tpu.memory_space<vmem>>, vector<8x128xf32>
      tpu.vector_store %arg13[%c0_37, %c0_38], %66 {strides = array<i32>} : memref<8x128xf32, #tpu.memory_space<vmem>>, vector<8x128xf32>,
      %c0_39 = arith.constant 0 : index
      %c0_40 = arith.constant 0 : index
      %68 = vector.load %arg4[%c0_39, %c0_40] : memref<8x128xf32, #tpu.memory_space<vmem>>, vector<8x128xf32>
      %c0_41 = arith.constant 0 : index
      %c0_42 = arith.constant 0 : index
      %69 = vector.load %arg14[%c0_41, %c0_42] : memref<8x128xf32, #tpu.memory_space<vmem>>, vector<8x128xf32>
      tpu.vector_store %arg14[%c0_41, %c0_42], %68 {strides = array<i32>} : memref<8x128xf32, #tpu.memory_space<vmem>>, vector<8x128xf32>,
    } else {
    }
    %c0 = arith.constant 0 : index
    %c0_1 = arith.constant 0 : index
    %c0_2 = arith.constant 0 : index
    %3 = vector.load %arg2[%c0, %c0_1, %c0_2] : memref<1x8x2xf32, #tpu.memory_space<vmem>>, vector<1x8x2xf32>
    %4 = vector.shape_cast %3 : vector<1x8x2xf32> to vector<8x2xf32>
    %c0_3 = arith.constant 0 : index
    %c0_4 = arith.constant 0 : index
    %5 = vector.load %arg13[%c0_3, %c0_4] : memref<8x128xf32, #tpu.memory_space<vmem>>, vector<8x128xf32>
    %c0_5 = arith.constant 0 : index
    %c0_6 = arith.constant 0 : index
    %6 = vector.load %arg14[%c0_5, %c0_6] : memref<8x128xf32, #tpu.memory_space<vmem>>, vector<8x128xf32>
    %7 = vector.extract_strided_slice %4 {offsets = [0, 0], sizes = [8, 1], strides = [1, 1]} : vector<8x2xf32> to vector<8x1xf32>
    %c0_7 = arith.constant 0 : index
    %c0_8 = arith.constant 0 : index
    %8 = vector.load %arg5[%c0_7, %c0_8] : memref<2x64xf32, #tpu.memory_space<vmem>>, vector<1x64xf32>
    %9 = vector.broadcast %7 : vector<8x1xf32> to vector<8x64xf32>
    %10 = vector.broadcast %8 : vector<1x64xf32> to vector<8x64xf32>
    %11 = arith.mulf %9, %10 : vector<8x64xf32>
    %12 = vector.extract_strided_slice %4 {offsets = [0, 1], sizes = [8, 1], strides = [1, 1]} : vector<8x2xf32> to vector<8x1xf32>
    %c1 = arith.constant 1 : index
    %c0_9 = arith.constant 0 : index
    %13 = vector.load %arg5[%c1, %c0_9] : memref<2x64xf32, #tpu.memory_space<vmem>>, vector<1x64xf32>
    %14 = vector.broadcast %12 : vector<8x1xf32> to vector<8x64xf32>
    %15 = vector.broadcast %13 : vector<1x64xf32> to vector<8x64xf32>
    %16 = arith.mulf %14, %15 : vector<8x64xf32>
    %17 = arith.addf %11, %16 : vector<8x64xf32>
    %c0_10 = arith.constant 0 : index
    %c0_11 = arith.constant 0 : index
    %18 = vector.load %arg6[%c0_10, %c0_11] : memref<1x64xf32, #tpu.memory_space<vmem>>, vector<1x64xf32>
    %19 = vector.broadcast %18 : vector<1x64xf32> to vector<8x64xf32>
    %20 = arith.addf %17, %19 : vector<8x64xf32>
    %cst = arith.constant 0.000000e+00 : f32
    %21 = vector.broadcast %cst : f32 to vector<8x64xf32>
    %22 = arith.maximumf %20, %21 : vector<8x64xf32>
    %c0_12 = arith.constant 0 : index
    %c0_13 = arith.constant 0 : index
    %23 = vector.load %arg7[%c0_12, %c0_13] : memref<64x512xf32, #tpu.memory_space<vmem>>, vector<64x512xf32>
    %cst_14 = arith.constant dense<0.000000e+00> : vector<8x512xf32>
    %24 = tpu.matmul %22, %23, %cst_14 {dimension_numbers = #tpu.dot_dimension_numbers<[1], [0], [0], [1], [0, 0, 1, 1], [], []>} : vector<8x64xf32>, vector<64x512xf32>, vector<8x512xf32> -> vector<8x512xf32>
    %c0_15 = arith.constant 0 : index
    %c0_16 = arith.constant 0 : index
    %25 = vector.load %arg8[%c0_15, %c0_16] : memref<128x512xf32, #tpu.memory_space<vmem>>, vector<128x512xf32>
    %cst_17 = arith.constant dense<0.000000e+00> : vector<8x512xf32>
    %26 = tpu.matmul %5, %25, %cst_17 {dimension_numbers = #tpu.dot_dimension_numbers<[1], [0], [0], [1], [0, 0, 1, 1], [], []>} : vector<8x128xf32>, vector<128x512xf32>, vector<8x512xf32> -> vector<8x512xf32>
    %27 = arith.addf %24, %26 : vector<8x512xf32>
    %c0_18 = arith.constant 0 : index
    %c0_19 = arith.constant 0 : index
    %28 = vector.load %arg9[%c0_18, %c0_19] : memref<1x512xf32, #tpu.memory_space<vmem>>, vector<1x512xf32>
    %29 = vector.broadcast %28 : vector<1x512xf32> to vector<8x512xf32>
    %30 = arith.addf %27, %29 : vector<8x512xf32>
    %31 = vector.extract_strided_slice %30 {offsets = [0, 0], sizes = [8, 128], strides = [1, 1]} : vector<8x512xf32> to vector<8x128xf32>
    %32 = arith.negf %31 : vector<8x128xf32>
    %33 = math.exp %32 : vector<8x128xf32>
    %cst_20 = arith.constant 1.000000e+00 : f32
    %34 = vector.broadcast %cst_20 : f32 to vector<8x128xf32>
    %35 = arith.addf %34, %33 : vector<8x128xf32>
    %36 = arith.divf %34, %35 : vector<8x128xf32>
    %37 = vector.extract_strided_slice %30 {offsets = [0, 128], sizes = [8, 128], strides = [1, 1]} : vector<8x512xf32> to vector<8x128xf32>
    %38 = arith.negf %37 : vector<8x128xf32>
    %39 = math.exp %38 : vector<8x128xf32>
    %cst_21 = arith.constant 1.000000e+00 : f32
    %40 = vector.broadcast %cst_21 : f32 to vector<8x128xf32>
    %41 = arith.addf %40, %39 : vector<8x128xf32>
    %42 = arith.divf %40, %41 : vector<8x128xf32>
    %43 = vector.extract_strided_slice %30 {offsets = [0, 256], sizes = [8, 128], strides = [1, 1]} : vector<8x512xf32> to vector<8x128xf32>
    %44 = math.tanh %43 : vector<8x128xf32>
    %45 = vector.extract_strided_slice %30 {offsets = [0, 384], sizes = [8, 128], strides = [1, 1]} : vector<8x512xf32> to vector<8x128xf32>
    %46 = arith.negf %45 : vector<8x128xf32>
    %47 = math.exp %46 : vector<8x128xf32>
    %cst_22 = arith.constant 1.000000e+00 : f32
    %48 = vector.broadcast %cst_22 : f32 to vector<8x128xf32>
    %49 = arith.addf %48, %47 : vector<8x128xf32>
    %50 = arith.divf %48, %49 : vector<8x128xf32>
    %51 = arith.mulf %42, %6 : vector<8x128xf32>
    %52 = arith.mulf %36, %44 : vector<8x128xf32>
    %53 = arith.addf %51, %52 : vector<8x128xf32>
    %54 = math.tanh %53 : vector<8x128xf32>
    %55 = arith.mulf %50, %54 : vector<8x128xf32>
    %c0_23 = arith.constant 0 : index
    %c0_24 = arith.constant 0 : index
    %56 = vector.load %arg10[%c0_23, %c0_24] : memref<128x128xf32, #tpu.memory_space<vmem>>, vector<128x128xf32>
    %cst_25 = arith.constant dense<0.000000e+00> : vector<8x128xf32>
    %57 = tpu.matmul %55, %56, %cst_25 {dimension_numbers = #tpu.dot_dimension_numbers<[1], [0], [0], [1], [0, 0, 1, 1], [], []>} : vector<8x128xf32>, vector<128x128xf32>, vector<8x128xf32> -> vector<8x128xf32>
    %c0_26 = arith.constant 0 : index
    %c0_27 = arith.constant 0 : index
    %58 = vector.load %arg11[%c0_26, %c0_27] : memref<1x128xf32, #tpu.memory_space<vmem>>, vector<1x128xf32>
    %59 = vector.broadcast %58 : vector<1x128xf32> to vector<8x128xf32>
    %60 = arith.addf %57, %59 : vector<8x128xf32>
    %c0_28 = arith.constant 0 : index
    %c0_29 = arith.constant 0 : index
    %c0_30 = arith.constant 0 : index
    %61 = vector.load %arg12[%c0_28, %c0_29, %c0_30] : memref<1x8x128xf32, #tpu.memory_space<vmem>>, vector<1x8x128xf32>
    %62 = vector.shape_cast %61 : vector<1x8x128xf32> to vector<8x128xf32>
    %63 = vector.shape_cast %60 : vector<8x128xf32> to vector<1x8x128xf32>
    tpu.vector_store %arg12[%c0_28, %c0_29, %c0_30], %63 {strides = array<i32>} : memref<1x8x128xf32, #tpu.memory_space<vmem>>, vector<1x8x128xf32>,
    %c0_31 = arith.constant 0 : index
    %c0_32 = arith.constant 0 : index
    %64 = vector.load %arg13[%c0_31, %c0_32] : memref<8x128xf32, #tpu.memory_space<vmem>>, vector<8x128xf32>
    tpu.vector_store %arg13[%c0_31, %c0_32], %55 {strides = array<i32>} : memref<8x128xf32, #tpu.memory_space<vmem>>, vector<8x128xf32>,
    %c0_33 = arith.constant 0 : index
    %c0_34 = arith.constant 0 : index
    %65 = vector.load %arg14[%c0_33, %c0_34] : memref<8x128xf32, #tpu.memory_space<vmem>>, vector<8x128xf32>
    tpu.vector_store %arg14[%c0_33, %c0_34], %53 {strides = array<i32>} : memref<8x128xf32, #tpu.memory_space<vmem>>, vector<8x128xf32>,
    return
  }
  func.func @transform_0(%arg0: i32, %arg1: i32) -> (i32, i32, i32) {
    %c0_i32 = arith.constant 0 : i32
    %c0_i32_0 = arith.constant 0 : i32
    return %arg1, %arg0, %c0_i32 : i32, i32, i32
  }
  func.func @transform_1(%arg0: i32, %arg1: i32) -> (i32, i32) {
    %c0_i32 = arith.constant 0 : i32
    %c0_i32_0 = arith.constant 0 : i32
    return %arg0, %c0_i32 : i32, i32
  }
  func.func @transform_2(%arg0: i32, %arg1: i32) -> (i32, i32) {
    %c0_i32 = arith.constant 0 : i32
    %c0_i32_0 = arith.constant 0 : i32
    return %arg0, %c0_i32 : i32, i32
  }
  func.func @transform_3(%arg0: i32, %arg1: i32) -> (i32, i32) {
    %c0_i32 = arith.constant 0 : i32
    %c0_i32_0 = arith.constant 0 : i32
    %c0_i32_1 = arith.constant 0 : i32
    return %c0_i32, %c0_i32_0 : i32, i32
  }
  func.func @transform_4(%arg0: i32, %arg1: i32) -> (i32, i32) {
    %c0_i32 = arith.constant 0 : i32
    %c0_i32_0 = arith.constant 0 : i32
    %c0_i32_1 = arith.constant 0 : i32
    return %c0_i32, %c0_i32_0 : i32, i32
  }
  func.func @transform_5(%arg0: i32, %arg1: i32) -> (i32, i32) {
    %c0_i32 = arith.constant 0 : i32
    %c0_i32_0 = arith.constant 0 : i32
    %c0_i32_1 = arith.constant 0 : i32
    return %c0_i32, %c0_i32_0 : i32, i32
  }
  func.func @transform_6(%arg0: i32, %arg1: i32) -> (i32, i32) {
    %c0_i32 = arith.constant 0 : i32
    %c0_i32_0 = arith.constant 0 : i32
    %c0_i32_1 = arith.constant 0 : i32
    return %c0_i32, %c0_i32_0 : i32, i32
  }
  func.func @transform_7(%arg0: i32, %arg1: i32) -> (i32, i32) {
    %c0_i32 = arith.constant 0 : i32
    %c0_i32_0 = arith.constant 0 : i32
    %c0_i32_1 = arith.constant 0 : i32
    return %c0_i32, %c0_i32_0 : i32, i32
  }
  func.func @transform_8(%arg0: i32, %arg1: i32) -> (i32, i32) {
    %c0_i32 = arith.constant 0 : i32
    %c0_i32_0 = arith.constant 0 : i32
    %c0_i32_1 = arith.constant 0 : i32
    return %c0_i32, %c0_i32_0 : i32, i32
  }
  func.func @transform_9(%arg0: i32, %arg1: i32) -> (i32, i32) {
    %c0_i32 = arith.constant 0 : i32
    %c0_i32_0 = arith.constant 0 : i32
    %c0_i32_1 = arith.constant 0 : i32
    return %c0_i32, %c0_i32_0 : i32, i32
  }
  func.func @transform_10(%arg0: i32, %arg1: i32) -> (i32, i32, i32) {
    %c0_i32 = arith.constant 0 : i32
    %c0_i32_0 = arith.constant 0 : i32
    return %arg1, %arg0, %c0_i32 : i32, i32, i32
  }
  func.func @transform_11(%arg0: i32, %arg1: i32) -> (i32, i32) {
    %c0_i32 = arith.constant 0 : i32
    %c0_i32_0 = arith.constant 0 : i32
    return %arg0, %c0_i32 : i32, i32
  }
  func.func @transform_12(%arg0: i32, %arg1: i32) -> (i32, i32) {
    %c0_i32 = arith.constant 0 : i32
    %c0_i32_0 = arith.constant 0 : i32
    return %arg0, %c0_i32 : i32, i32
  }
}

</mosaic_0001>

<llo_original>
// kernel: lstm1l_rollout.1
$region0: #{lstm1l_rollout.1}
  #allocation0 [shape = 'u32[]', space=smem, size = 0x4, offset = 0x4, fixed_abs, tag = 'smem constant byte address 0x4 - core index']
  #allocation1 [shape = 'u32[144,128]{1,0:T(1,128)}', space=vmem, size = 0x12000, scoped, tag = 'internal scratch']
  %s0 = inlined_call_operand.vmem [shape: f32[1,8,2], index: 0, kind: input, shape index: {}]
  %s1 = inlined_call_operand.hbm [shape: f32[8,128], index: 1, kind: input, shape index: {}, may-alias: {1,11}]
  %s2 = inlined_call_operand.hbm [shape: f32[8,128], index: 2, kind: input, shape index: {}, may-alias: {2,12}]
  %s3 = inlined_call_operand.vmem [shape: f32[2,64], index: 3, kind: input, shape index: {}]
  %s4 = inlined_call_operand.vmem [shape: f32[1,64], index: 4, kind: input, shape index: {}]
  %s5 = inlined_call_operand.hbm [shape: f32[64,512], index: 5, kind: input, shape index: {}]
  %s6 = inlined_call_operand.hbm [shape: f32[128,512], index: 6, kind: input, shape index: {}]
  %s7 = inlined_call_operand.vmem [shape: f32[1,512], index: 7, kind: input, shape index: {}]
  %s8 = inlined_call_operand.hbm [shape: f32[128,128], index: 8, kind: input, shape index: {}]
  %s9 = inlined_call_operand.vmem [shape: f32[1,128], index: 9, kind: input, shape index: {}]
  %s10 = inlined_call_operand.hbm [shape: f32[1,8,128], index: 10, kind: output, shape index: {0}]
  %s11 = inlined_call_operand.hbm [shape: f32[8,128], index: 11, kind: output, shape index: {1}, may-alias: {1,11}]
  %s12 = inlined_call_operand.hbm [shape: f32[8,128], index: 12, kind: output, shape index: {2}, may-alias: {2,12}]
  %13 = xla_tuple %s10, %s11, %s12
  %s14 = sld [smem:[#allocation0]]
  $region90: #{lstm1l_rollout.1} parent=0
    _
  %s16 = ssub.s32 1, %s14
  %s17 = scalar_select 0, %s16, %s14
  $region1: #{lstm1l_rollout.1} parent=0
    #allocation2 [shape = 'u8[4096]{0}', space=vmem, size = 0x1000, scoped, tag = 'input window, operand 1, single buffered']
    #allocation3 [shape = 's32[1]{0}', space=sflag, size = 0x4, scoped, tag = 'scoped memory for lstm1l_rollout.1']
    #allocation4 [shape = 's32[1]{0}', space=sflag, size = 0x4, scoped, tag = 'scoped memory for lstm1l_rollout.1']
    #allocation5 [shape = 'u8[4096]{0}', space=vmem, size = 0x1000, scoped, tag = 'input window, operand 2, single buffered']
    #allocation6 [shape = 's32[1]{0}', space=sflag, size = 0x4, scoped, tag = 'scoped memory for lstm1l_rollout.1']
    #allocation7 [shape = 'u8[131072]{0}', space=vmem, size = 0x20000, scoped, tag = 'input window, operand 5, single buffered']
    #allocation8 [shape = 'u8[262144]{0}', space=vmem, size = 0x40000, scoped, tag = 'input window, operand 6, single buffered']
    #allocation9 [shape = 's32[1]{0}', space=sflag, size = 0x4, scoped, tag = 'scoped memory for lstm1l_rollout.1']
    #allocation10 [shape = 'u8[65536]{0}', space=vmem, size = 0x10000, scoped, tag = 'input window, operand 8, single buffered']
    #allocation11 [shape = 'u8[4096]{0}', space=vmem, size = 0x1000, scoped, tag = 'output window, operand 0, single buffered']
    #allocation12 [shape = 'u8[4096]{0}', space=vmem, size = 0x1000, scoped, tag = 'output window, operand 1, single buffered']
    #allocation13 [shape = 's32[1]{0}', space=sflag, size = 0x4, scoped, tag = 'scoped memory for lstm1l_rollout.1']
    #allocation14 [shape = 'u8[4096]{0}', space=vmem, size = 0x1000, scoped, tag = 'output window, operand 2, single buffered']
    %18 = vsyncpa [#allocation3], 0
    %19 = vsyncpa [#allocation6], 0
    %20 = vsyncpa [#allocation9], 0
    %21 = vsyncpa [#allocation4], 0
    %22 = vsyncpa [#allocation13], 0
    // Predicated region
    $region2: #{lstm1l_rollout.1} parent=1 // pred_check
      _
    $region3: #{lstm1l_rollout.1} parent=1 // pred_check_branch
      %24 = sbr.rel (0) target = $region5
    $region4: #{lstm1l_rollout.1} parent=1 // pred_region
      _
    $region5: #{lstm1l_rollout.1} parent=1 // pred_fallthru
      _
    // Predicated region
    $region6: #{lstm1l_rollout.1} parent=1 // pred_check
      _
    $region7: #{lstm1l_rollout.1} parent=1 // pred_check_branch
      %26 = sbr.rel (0) target = $region9
    $region8: #{lstm1l_rollout.1} parent=1 // pred_region
      %s28 = ssub.s32 128, 128
      %29 = vsyncadd [#allocation3], %s28
      %s31 = sshll.u32 [#allocation2], 4
      %s32 = int_to_ptr.vmem [resolvable:$true] %s31
      %34 = dma.hbm_to_vmem [thread:$0]  %s1, 128, %s32, [#allocation3]
    $region9: #{lstm1l_rollout.1} parent=1 // pred_fallthru
      _
    // Predicated region
    $region10: #{lstm1l_rollout.1} parent=1 // pred_check
      _
    $region11: #{lstm1l_rollout.1} parent=1 // pred_check_branch
      %36 = sbr.rel (0) target = $region13
    $region12: #{lstm1l_rollout.1} parent=1 // pred_region
      %s38 = ssub.s32 128, 128
      %39 = vsyncadd [#allocation6], %s38
      %s41 = sshll.u32 [#allocation5], 4
      %s42 = int_to_ptr.vmem [resolvable:$true] %s41
      %44 = dma.hbm_to_vmem [thread:$0]  %s2, 128, %s42, [#allocation6]
    $region13: #{lstm1l_rollout.1} parent=1 // pred_fallthru
      _
    // Predicated region
    $region14: #{lstm1l_rollout.1} parent=1 // pred_check
      _
    $region15: #{lstm1l_rollout.1} parent=1 // pred_check_branch
      %46 = sbr.rel (0) target = $region17
    $region16: #{lstm1l_rollout.1} parent=1 // pred_region
      _
    $region17: #{lstm1l_rollout.1} parent=1 // pred_fallthru
      _
    // Predicated region
    $region18: #{lstm1l_rollout.1} parent=1 // pred_check
      _
    $region19: #{lstm1l_rollout.1} parent=1 // pred_check_branch
      %48 = sbr.rel (0) target = $region21
    $region20: #{lstm1l_rollout.1} parent=1 // pred_region
      _
    $region21: #{lstm1l_rollout.1} parent=1 // pred_fallthru
      _
    // Predicated region
    $region22: #{lstm1l_rollout.1} parent=1 // pred_check
      _
    $region23: #{lstm1l_rollout.1} parent=1 // pred_check_branch
      %50 = sbr.rel (0) target = $region25
    $region24: #{lstm1l_rollout.1} parent=1 // pred_region
      %s52 = ssub.s32 4096, 4096
      %53 = vsyncadd [#allocation6], %s52
      %s54 = sshll.u32 [#allocation7], 4
      %s55 = int_to_ptr.vmem [resolvable:$true] %s54
      %60 = dma.hbm_to_vmem [thread:$0]  %s5, 4096, %s55, [#allocation6], 512, 512, 32
    $region25: #{lstm1l_rollout.1} parent=1 // pred_fallthru
      _
    // Predicated region
    $region26: #{lstm1l_rollout.1} parent=1 // pred_check
      _
    $region27: #{lstm1l_rollout.1} parent=1 // pred_check_branch
      %62 = sbr.rel (0) target = $region29
    $region28: #{lstm1l_rollout.1} parent=1 // pred_region
      %s64 = ssub.s32 8192, 8192
      %65 = vsyncadd [#allocation9], %s64
      %s66 = sshll.u32 [#allocation8], 4
      %s67 = int_to_ptr.vmem [resolvable:$true] %s66
      %72 = dma.hbm_to_vmem [thread:$0]  %s6, 8192, %s67, [#allocation9], 512, 512, 32
    $region29: #{lstm1l_rollout.1} parent=1 // pred_fallthru
      _
    // Predicated region
    $region30: #{lstm1l_rollout.1} parent=1 // pred_check
      _
    $region31: #{lstm1l_rollout.1} parent=1 // pred_check_branch
      %74 = sbr.rel (0) target = $region33
    $region32: #{lstm1l_rollout.1} parent=1 // pred_region
      _
    $region33: #{lstm1l_rollout.1} parent=1 // pred_fallthru
      _
    // Predicated region
    $region34: #{lstm1l_rollout.1} parent=1 // pred_check
      _
    $region35: #{lstm1l_rollout.1} parent=1 // pred_check_branch
      %76 = sbr.rel (0) target = $region37
    $region36: #{lstm1l_rollout.1} parent=1 // pred_region
      %s78 = ssub.s32 2048, 2048
      %79 = vsyncadd [#allocation9], %s78
      %s80 = sshll.u32 [#allocation10], 4
      %s81 = int_to_ptr.vmem [resolvable:$true] %s80
      %86 = dma.hbm_to_vmem [thread:$0]  %s8, 2048, %s81, [#allocation9], 128, 128, 8
    $region37: #{lstm1l_rollout.1} parent=1 // pred_fallthru
      _
    // Predicated region
    $region38: #{lstm1l_rollout.1} parent=1 // pred_check
      _
    $region39: #{lstm1l_rollout.1} parent=1 // pred_check_branch
      %88 = sbr.rel (0) target = $region41
    $region40: #{lstm1l_rollout.1} parent=1 // pred_region
      _
    $region41: #{lstm1l_rollout.1} parent=1 // pred_fallthru
      _
    // Predicated region
    $region42: #{lstm1l_rollout.1} parent=1 // pred_check
      _
    $region43: #{lstm1l_rollout.1} parent=1 // pred_check_branch
      %90 = sbr.rel (0) target = $region45
    $region44: #{lstm1l_rollout.1} parent=1 // pred_region
      %91 = dma.done [#allocation3], 128
    $region45: #{lstm1l_rollout.1} parent=1 // pred_fallthru
      _
    // Predicated region
    $region46: #{lstm1l_rollout.1} parent=1 // pred_check
      _
    $region47: #{lstm1l_rollout.1} parent=1 // pred_check_branch
      %93 = sbr.rel (0) target = $region49
    $region48: #{lstm1l_rollout.1} parent=1 // pred_region
      %94 = dma.done [#allocation6], 128
    $region49: #{lstm1l_rollout.1} parent=1 // pred_fallthru
      _
    // Predicated region
    $region50: #{lstm1l_rollout.1} parent=1 // pred_check
      _
    $region51: #{lstm1l_rollout.1} parent=1 // pred_check_branch
      %96 = sbr.rel (0) target = $region53
    $region52: #{lstm1l_rollout.1} parent=1 // pred_region
      %97 = dma.done [#allocation6], 4096
    $region53: #{lstm1l_rollout.1} parent=1 // pred_fallthru
      _
    // Predicated region
    $region54: #{lstm1l_rollout.1} parent=1 // pred_check
      _
    $region55: #{lstm1l_rollout.1} parent=1 // pred_check_branch
      %99 = sbr.rel (0) target = $region57
    $region56: #{lstm1l_rollout.1} parent=1 // pred_region
      %100 = dma.done [#allocation9], 8192
    $region57: #{lstm1l_rollout.1} parent=1 // pred_fallthru
      _
    // Predicated region
    $region58: #{lstm1l_rollout.1} parent=1 // pred_check
      _
    $region59: #{lstm1l_rollout.1} parent=1 // pred_check_branch
      %102 = sbr.rel (0) target = $region61
    $region60: #{lstm1l_rollout.1} parent=1 // pred_region
      %103 = dma.done [#allocation9], 2048
    $region61: #{lstm1l_rollout.1} parent=1 // pred_fallthru
      _
    %p104 = scmp.eq.s32.totalorder 0, 0
    // Predicated region
    $region62: #{lstm1l_rollout.1} parent=1 // pred_check
      %p105 = pneg %p104
    $region63: #{lstm1l_rollout.1} parent=1 // pred_check_branch
      %107 = sbr.rel (%p105) target = $region65
    $region64: #{lstm1l_rollout.1} parent=1 // pred_region
      %v108 = vld [vmem:[#allocation2] sm:$0xff]
      %109 = vst [vmem:[#allocation12] sm:$0xff] %v108
      %v110 = vld [vmem:[#allocation5] sm:$0xff]
      %111 = vst [vmem:[#allocation14] sm:$0xff] %v110
    $region65: #{lstm1l_rollout.1} parent=1 // pred_fallthru
      _
    %v112 = vld [vmem:[%s0] sm:$0xff]
    %v113 = vld [vmem:[#allocation12] sm:$0xff]
    %v114 = vld [vmem:[#allocation14] sm:$0xff]
    %v115 = vld [vmem:[%s3] sm:$0x1]
    %117 = vset.pattern.permute.xlu0 0
    %118 = vperm.xlu0 %117, %v112
    %v119 = vpop.permute.xlu0 %118
    %v121 = vlaneseq
    %v122 = vshrl.u32 %v121, 7
    %v123 = vsub.s32 0, %v122
    %v124 = vrot.slane %v115, %v123
    %v125 = vmul.f32 %v119, %v124
    %v126 = vld [vmem:[%s3 + $0x1] sm:$0x1]
    %127 = vset.pattern.permute.xlu0 1
    %128 = vperm.xlu0 %127, %v112
    %v129 = vpop.permute.xlu0 %128
    %v131 = vlaneseq
    %v132 = vshrl.u32 %v131, 7
    %v133 = vsub.s32 0, %v132
    %v134 = vrot.slane %v126, %v133
    %v135 = vmul.f32 %v129, %v134
    %v136 = vadd.f32 %v125, %v135
    %v137 = vld [vmem:[%s4] sm:$0x1]
    %v139 = vlaneseq
    %v140 = vshrl.u32 %v139, 7
    %v141 = vsub.s32 0, %v140
    %v142 = vrot.slane %v137, %v141
    %v144 = vadd.f32 %v136, %v142
    %v145 = vmax.f32 %v144, 0.0
    %v146 = vld [vmem:[#allocation7] sm:$0xff]
    %v147 = vld [vmem:[#allocation7 + $0x8] sm:$0xff]
    %v148 = vld [vmem:[#allocation7 + $0x10] sm:$0xff]
    %v149 = vld [vmem:[#allocation7 + $0x18] sm:$0xff]
    %v150 = vld [vmem:[#allocation7 + $0x20] sm:$0xff]
    %v151 = vld [vmem:[#allocation7 + $0x28] sm:$0xff]
    %v152 = vld [vmem:[#allocation7 + $0x30] sm:$0xff]
    %v153 = vld [vmem:[#allocation7 + $0x38] sm:$0xff]
    %v154 = vld [vmem:[#allocation7 + $0x40] sm:$0xff]
    %v155 = vld [vmem:[#allocation7 + $0x48] sm:$0xff]
    %v156 = vld [vmem:[#allocation7 + $0x50] sm:$0xff]
    %v157 = vld [vmem:[#allocation7 + $0x58] sm:$0xff]
    %v158 = vld [vmem:[#allocation7 + $0x60] sm:$0xff]
    %v159 = vld [vmem:[#allocation7 + $0x68] sm:$0xff]
    %v160 = vld [vmem:[#allocation7 + $0x70] sm:$0xff]
    %v161 = vld [vmem:[#allocation7 + $0x78] sm:$0xff]
    %v162 = vld [vmem:[#allocation7 + $0x80] sm:$0xff]
    %v163 = vld [vmem:[#allocation7 + $0x88] sm:$0xff]
    %v164 = vld [vmem:[#allocation7 + $0x90] sm:$0xff]
    %v165 = vld [vmem:[#allocation7 + $0x98] sm:$0xff]
    %v166 = vld [vmem:[#allocation7 + $0xa0] sm:$0xff]
    %v167 = vld [vmem:[#allocation7 + $0xa8] sm:$0xff]
    %v168 = vld [vmem:[#allocation7 + $0xb0] sm:$0xff]
    %v169 = vld [vmem:[#allocation7 + $0xb8] sm:$0xff]
    %v170 = vld [vmem:[#allocation7 + $0xc0] sm:$0xff]
    %v171 = vld [vmem:[#allocation7 + $0xc8] sm:$0xff]
    %v172 = vld [vmem:[#allocation7 + $0xd0] sm:$0xff]
    %v173 = vld [vmem:[#allocation7 + $0xd8] sm:$0xff]
    %v174 = vld [vmem:[#allocation7 + $0xe0] sm:$0xff]
    %v175 = vld [vmem:[#allocation7 + $0xe8] sm:$0xff]
    %v176 = vld [vmem:[#allocation7 + $0xf0] sm:$0xff]
    %v177 = vld [vmem:[#allocation7 + $0xf8] sm:$0xff]
    %v178 = vld [vmem:[#allocation8] sm:$0xff]
    %v179 = vld [vmem:[#allocation8 + $0x8] sm:$0xff]
    %v180 = vld [vmem:[#allocation8 + $0x10] sm:$0xff]
    %v181 = vld [vmem:[#allocation8 + $0x18] sm:$0xff]
    %v182 = vld [vmem:[#allocation8 + $0x20] sm:$0xff]
    %v183 = vld [vmem:[#allocation8 + $0x28] sm:$0xff]
    %v184 = vld [vmem:[#allocation8 + $0x30] sm:$0xff]
    %v185 = vld [vmem:[#allocation8 + $0x38] sm:$0xff]
    %v186 = vld [vmem:[#allocation8 + $0x40] sm:$0xff]
    %v187 = vld [vmem:[#allocation8 + $0x48] sm:$0xff]
    %v188 = vld [vmem:[#allocation8 + $0x50] sm:$0xff]
    %v189 = vld [vmem:[#allocation8 + $0x58] sm:$0xff]
    %v190 = vld [vmem:[#allocation8 + $0x60] sm:$0xff]
    %v191 = vld [vmem:[#allocation8 + $0x68] sm:$0xff]
    %v192 = vld [vmem:[#allocation8 + $0x70] sm:$0xff]
    %v193 = vld [vmem:[#allocation8 + $0x78] sm:$0xff]
    %v194 = vld [vmem:[#allocation8 + $0x80] sm:$0xff]
    %v195 = vld [vmem:[#allocation8 + $0x88] sm:$0xff]
    %v196 = vld [vmem:[#allocation8 + $0x90] sm:$0xff]
    %v197 = vld [vmem:[#allocation8 + $0x98] sm:$0xff]
    %v198 = vld [vmem:[#allocation8 + $0xa0] sm:$0xff]
    %v199 = vld [vmem:[#allocation8 + $0xa8] sm:$0xff]
    %v200 = vld [vmem:[#allocation8 + $0xb0] sm:$0xff]
    %v201 = vld [vmem:[#allocation8 + $0xb8] sm:$0xff]
    %v202 = vld [vmem:[#allocation8 + $0xc0] sm:$0xff]
    %v203 = vld [vmem:[#allocation8 + $0xc8] sm:$0xff]
    %v204 = vld [vmem:[#allocation8 + $0xd0] sm:$0xff]
    %v205 = vld [vmem:[#allocation8 + $0xd8] sm:$0xff]
    %v206 = vld [vmem:[#allocation8 + $0xe0] sm:$0xff]
    %v207 = vld [vmem:[#allocation8 + $0xe8] sm:$0xff]
    %v208 = vld [vmem:[#allocation8 + $0xf0] sm:$0xff]
    %v209 = vld [vmem:[#allocation8 + $0xf8] sm:$0xff]
    %v210 = vld [vmem:[#allocation8 + $0x100] sm:$0xff]
    %v211 = vld [vmem:[#allocation8 + $0x108] sm:$0xff]
    %v212 = vld [vmem:[#allocation8 + $0x110] sm:$0xff]
    %v213 = vld [vmem:[#allocation8 + $0x118] sm:$0xff]
    %v214 = vld [vmem:[#allocation8 + $0x120] sm:$0xff]
    %v215 = vld [vmem:[#allocation8 + $0x128] sm:$0xff]
    %v216 = vld [vmem:[#allocation8 + $0x130] sm:$0xff]
    %v217 = vld [vmem:[#allocation8 + $0x138] sm:$0xff]
    %v218 = vld [vmem:[#allocation8 + $0x140] sm:$0xff]
    %v219 = vld [vmem:[#allocation8 + $0x148] sm:$0xff]
    %v220 = vld [vmem:[#allocation8 + $0x150] sm:$0xff]
    %v221 = vld [vmem:[#allocation8 + $0x158] sm:$0xff]
    %v222 = vld [vmem:[#allocation8 + $0x160] sm:$0xff]
    %v223 = vld [vmem:[#allocation8 + $0x168] sm:$0xff]
    %v224 = vld [vmem:[#allocation8 + $0x170] sm:$0xff]
    %v225 = vld [vmem:[#allocation8 + $0x178] sm:$0xff]
    %v226 = vld [vmem:[#allocation8 + $0x180] sm:$0xff]
    %v227 = vld [vmem:[#allocation8 + $0x188] sm:$0xff]
    %v228 = vld [vmem:[#allocation8 + $0x190] sm:$0xff]
    %v229 = vld [vmem:[#allocation8 + $0x198] sm:$0xff]
    %v230 = vld [vmem:[#allocation8 + $0x1a0] sm:$0xff]
    %v231 = vld [vmem:[#allocation8 + $0x1a8] sm:$0xff]
    %v232 = vld [vmem:[#allocation8 + $0x1b0] sm:$0xff]
    %v233 = vld [vmem:[#allocation8 + $0x1b8] sm:$0xff]
    %v234 = vld [vmem:[#allocation8 + $0x1c0] sm:$0xff]
    %v235 = vld [vmem:[#allocation8 + $0x1c8] sm:$0xff]
    %v236 = vld [vmem:[#allocation8 + $0x1d0] sm:$0xff]
    %v237 = vld [vmem:[#allocation8 + $0x1d8] sm:$0xff]
    %v238 = vld [vmem:[#allocation8 + $0x1e0] sm:$0xff]
    %v239 = vld [vmem:[#allocation8 + $0x1e8] sm:$0xff]
    %v240 = vld [vmem:[#allocation8 + $0x1f0] sm:$0xff]
    %v241 = vld [vmem:[#allocation8 + $0x1f8] sm:$0xff]
    %242 = vmatprep.subr.mxu0 %v239
    %243 = vmatpush1.msra.mxu0 %v238
    %244 = vmatprep.subr.mxu0 %v235
    %245 = vmatpush1.msra.mxu0 %v234
    %246 = vmatprep.subr.mxu0 %v231
    %247 = vmatpush1.msra.mxu0 %v230
    %248 = vmatprep.subr.mxu0 %v227
    %249 = vmatpush1.msra.mxu0 %v226
    %250 = vmatprep.subr.mxu0 %v223
    %251 = vmatpush1.msra.mxu0 %v222
    %252 = vmatprep.subr.mxu0 %v219
    %253 = vmatpush1.msra.mxu0 %v218
    %254 = vmatprep.subr.mxu0 %v215
    %255 = vmatpush1.msra.mxu0 %v214
    %256 = vmatprep.subr.mxu0 %v211
    %257 = vmatpush1.msra.mxu0 %v210
    %258 = vmatprep.subr.mxu0 %v207
    %259 = vmatpush1.msra.mxu0 %v206
    %260 = vmatprep.subr.mxu0 %v203
    %261 = vmatpush1.msra.mxu0 %v202
    %262 = vmatprep.subr.mxu0 %v199
    %263 = vmatpush1.msra.mxu0 %v198
    %264 = vmatprep.subr.mxu0 %v195
    %265 = vmatpush1.msra.mxu0 %v194
    %266 = vmatprep.subr.mxu0 %v191
    %267 = vmatpush1.msra.mxu0 %v190
    %268 = vmatprep.subr.mxu0 %v187
    %269 = vmatpush1.msra.mxu0 %v186
    %270 = vmatprep.subr.mxu0 %v183
    %271 = vmatpush1.msra.mxu0 %v182
    %272 = vmatprep.subr.mxu0 %v179
    %273 = vmatpush1.msra.mxu0 %v178
    %274 = vmatprep.subr.mxu0 0.0
    %275 = vmatpush2.msra.mxu0 0.0
    %276 = vmatprep.subr.mxu0 0.0
    %277 = vmatpush2.msra.mxu0 0.0
    %278 = vmatprep.subr.mxu0 0.0
    %279 = vmatpush2.msra.mxu0 0.0
    %280 = vmatprep.subr.mxu0 0.0
    %281 = vmatpush2.msra.mxu0 0.0
    %282 = vmatprep.subr.mxu0 0.0
    %283 = vmatpush2.msra.mxu0 0.0
    %284 = vmatprep.subr.mxu0 0.0
    %285 = vmatpush2.msra.mxu0 0.0
    %286 = vmatprep.subr.mxu0 0.0
    %287 = vmatpush2.msra.mxu0 0.0
    %288 = vmatprep.subr.mxu0 0.0
    %289 = vmatpush2.msra.mxu0 0.0
    %290 = vmatprep.subr.mxu0 0.0
    %291 = vmatpush2.msra.mxu0 0.0
    %292 = vmatprep.subr.mxu0 0.0
    %293 = vmatpush2.msra.mxu0 0.0
    %294 = vmatprep.subr.mxu0 0.0
    %295 = vmatpush2.msra.mxu0 0.0
    %296 = vmatprep.subr.mxu0 0.0
    %297 = vmatpush2.msra.mxu0 0.0
    %298 = vmatprep.subr.mxu0 0.0
    %299 = vmatpush2.msra.mxu0 0.0
    %300 = vmatprep.subr.mxu0 0.0
    %301 = vmatpush2.msra.mxu0 0.0
    %302 = vmatprep.subr.mxu0 0.0
    %303 = vmatpush2.msra.mxu0 0.0
    %304 = vmatprep.subr.mxu0 0.0
    %305 = vmatpush2.msra.mxu0 0.0
    %306 = vmatprep.mubr.f32.mxu0 0.0
    %307 = vmatmul.mubr.f32.gmra.mxu0 %v113
    %v308 = vpop.f32.mrf.mxu0
    %v309 = vadd.f32 0.0, %v308
    %v310 = vpop.f32.mrf.mxu0
    %v311 = vadd.f32 0.0, %v310
    %312 = vdwg.mxu0
    %313 = vmatprep.subr.mxu0 %v241
    %314 = vmatpush1.msra.mxu0 %v240
    %315 = vmatprep.subr.mxu0 %v237
    %316 = vmatpush1.msra.mxu0 %v236
    %317 = vmatprep.subr.mxu0 %v233
    %318 = vmatpush1.msra.mxu0 %v232
    %319 = vmatprep.subr.mxu0 %v229
    %320 = vmatpush1.msra.mxu0 %v228
    %321 = vmatprep.subr.mxu0 %v225
    %322 = vmatpush1.msra.mxu0 %v224
    %323 = vmatprep.subr.mxu0 %v221
    %324 = vmatpush1.msra.mxu0 %v220
    %325 = vmatprep.subr.mxu0 %v217
    %326 = vmatpush1.msra.mxu0 %v216
    %327 = vmatprep.subr.mxu0 %v213
    %328 = vmatpush1.msra.mxu0 %v212
    %329 = vmatprep.subr.mxu0 %v209
    %330 = vmatpush1.msra.mxu0 %v208
    %331 = vmatprep.subr.mxu0 %v205
    %332 = vmatpush1.msra.mxu0 %v204
    %333 = vmatprep.subr.mxu0 %v201
    %334 = vmatpush1.msra.mxu0 %v200
    %335 = vmatprep.subr.mxu0 %v197
    %336 = vmatpush1.msra.mxu0 %v196
    %337 = vmatprep.subr.mxu0 %v193
    %338 = vmatpush1.msra.mxu0 %v192
    %339 = vmatprep.subr.mxu0 %v189
    %340 = vmatpush1.msra.mxu0 %v188
    %341 = vmatprep.subr.mxu0 %v185
    %342 = vmatpush1.msra.mxu0 %v184
    %343 = vmatprep.subr.mxu0 %v181
    %344 = vmatpush1.msra.mxu0 %v180
    %345 = vmatprep.subr.mxu0 0.0
    %346 = vmatpush2.msra.mxu0 0.0
    %347 = vmatprep.subr.mxu0 0.0
    %348 = vmatpush2.msra.mxu0 0.0
    %349 = vmatprep.subr.mxu0 0.0
    %350 = vmatpush2.msra.mxu0 0.0
    %351 = vmatprep.subr.mxu0 0.0
    %352 = vmatpush2.msra.mxu0 0.0
    %353 = vmatprep.subr.mxu0 0.0
    %354 = vmatpush2.msra.mxu0 0.0
    %355 = vmatprep.subr.mxu0 0.0
    %356 = vmatpush2.msra.mxu0 0.0
    %357 = vmatprep.subr.mxu0 0.0
    %358 = vmatpush2.msra.mxu0 0.0
    %359 = vmatprep.subr.mxu0 0.0
    %360 = vmatpush2.msra.mxu0 0.0
    %361 = vmatprep.subr.mxu0 0.0
    %362 = vmatpush2.msra.mxu0 0.0
    %363 = vmatprep.subr.mxu0 0.0
    %364 = vmatpush2.msra.mxu0 0.0
    %365 = vmatprep.subr.mxu0 0.0
    %366 = vmatpush2.msra.mxu0 0.0
    %367 = vmatprep.subr.mxu0 0.0
    %368 = vmatpush2.msra.mxu0 0.0
    %369 = vmatprep.subr.mxu0 0.0
    %370 = vmatpush2.msra.mxu0 0.0
    %371 = vmatprep.subr.mxu0 0.0
    %372 = vmatpush2.msra.mxu0 0.0
    %373 = vmatprep.subr.mxu0 0.0
    %374 = vmatpush2.msra.mxu0 0.0
    %375 = vmatprep.subr.mxu0 0.0
    %376 = vmatpush2.msra.mxu0 0.0
    %377 = vmatprep.mubr.f32.mxu0 0.0
    %378 = vmatmul.mubr.f32.gmra.mxu0 %v113
    %v379 = vpop.f32.mrf.mxu0
    %v380 = vadd.f32 0.0, %v379
    %v381 = vpop.f32.mrf.mxu0
    %v382 = vadd.f32 0.0, %v381
    %383 = vdwg.mxu0
    %vm384 = vcmask 523264
    %v386 = vsel %vm384, %v145, 0
    %388 = vmatprep.subr.mxu0 0.0
    %389 = vmatpush1.msra.mxu0 0.0
    %390 = vmatprep.subr.mxu0 0.0
    %391 = vmatpush1.msra.mxu0 0.0
    %392 = vmatprep.subr.mxu0 0.0
    %393 = vmatpush1.msra.mxu0 0.0
    %394 = vmatprep.subr.mxu0 0.0
    %395 = vmatpush1.msra.mxu0 0.0
    %396 = vmatprep.subr.mxu0 0.0
    %397 = vmatpush1.msra.mxu0 0.0
    %398 = vmatprep.subr.mxu0 0.0
    %399 = vmatpush1.msra.mxu0 0.0
    %400 = vmatprep.subr.mxu0 0.0
    %401 = vmatpush1.msra.mxu0 0.0
    %402 = vmatprep.subr.mxu0 0.0
    %403 = vmatpush1.msra.mxu0 0.0
    %404 = vmatprep.subr.mxu0 %v175
    %405 = vmatpush1.msra.mxu0 %v174
    %406 = vmatprep.subr.mxu0 %v171
    %407 = vmatpush1.msra.mxu0 %v170
    %408 = vmatprep.subr.mxu0 %v167
    %409 = vmatpush1.msra.mxu0 %v166
    %410 = vmatprep.subr.mxu0 %v163
    %411 = vmatpush1.msra.mxu0 %v162
    %412 = vmatprep.subr.mxu0 %v159
    %413 = vmatpush1.msra.mxu0 %v158
    %414 = vmatprep.subr.mxu0 %v155
    %415 = vmatpush1.msra.mxu0 %v154
    %416 = vmatprep.subr.mxu0 %v151
    %417 = vmatpush1.msra.mxu0 %v150
    %418 = vmatprep.subr.mxu0 %v147
    %419 = vmatpush1.msra.mxu0 %v146
    %420 = vmatprep.subr.mxu0 0.0
    %421 = vmatpush2.msra.mxu0 0.0
    %422 = vmatprep.subr.mxu0 0.0
    %423 = vmatpush2.msra.mxu0 0.0
    %424 = vmatprep.subr.mxu0 0.0
    %425 = vmatpush2.msra.mxu0 0.0
    %426 = vmatprep.subr.mxu0 0.0
    %427 = vmatpush2.msra.mxu0 0.0
    %428 = vmatprep.subr.mxu0 0.0
    %429 = vmatpush2.msra.mxu0 0.0
    %430 = vmatprep.subr.mxu0 0.0
    %431 = vmatpush2.msra.mxu0 0.0
    %432 = vmatprep.subr.mxu0 0.0
    %433 = vmatpush2.msra.mxu0 0.0
    %434 = vmatprep.subr.mxu0 0.0
    %435 = vmatpush2.msra.mxu0 0.0
    %436 = vmatprep.subr.mxu0 0.0
    %437 = vmatpush2.msra.mxu0 0.0
    %438 = vmatprep.subr.mxu0 0.0
    %439 = vmatpush2.msra.mxu0 0.0
    %440 = vmatprep.subr.mxu0 0.0
    %441 = vmatpush2.msra.mxu0 0.0
    %442 = vmatprep.subr.mxu0 0.0
    %443 = vmatpush2.msra.mxu0 0.0
    %444 = vmatprep.subr.mxu0 0.0
    %445 = vmatpush2.msra.mxu0 0.0
    %446 = vmatprep.subr.mxu0 0.0
    %447 = vmatpush2.msra.mxu0 0.0
    %448 = vmatprep.subr.mxu0 0.0
    %449 = vmatpush2.msra.mxu0 0.0
    %450 = vmatprep.subr.mxu0 0.0
    %451 = vmatpush2.msra.mxu0 0.0
    %452 = vmatprep.mubr.f32.mxu0 0.0
    %453 = vmatmul.mubr.f32.gmra.mxu0 %v386
    %v454 = vpop.f32.mrf.mxu0
    %v455 = vadd.f32 %v309, %v454
    %v456 = vpop.f32.mrf.mxu0
    %v457 = vadd.f32 %v311, %v456
    %458 = vdwg.mxu0
    %459 = vmatprep.subr.mxu0 0.0
    %460 = vmatpush1.msra.mxu0 0.0
    %461 = vmatprep.subr.mxu0 0.0
    %462 = vmatpush1.msra.mxu0 0.0
    %463 = vmatprep.subr.mxu0 0.0
    %464 = vmatpush1.msra.mxu0 0.0
    %465 = vmatprep.subr.mxu0 0.0
    %466 = vmatpush1.msra.mxu0 0.0
    %467 = vmatprep.subr.mxu0 0.0
    %468 = vmatpush1.msra.mxu0 0.0
    %469 = vmatprep.subr.mxu0 0.0
    %470 = vmatpush1.msra.mxu0 0.0
    %471 = vmatprep.subr.mxu0 0.0
    %472 = vmatpush1.msra.mxu0 0.0
    %473 = vmatprep.subr.mxu0 0.0
    %474 = vmatpush1.msra.mxu0 0.0
    %475 = vmatprep.subr.mxu0 %v177
    %476 = vmatpush1.msra.mxu0 %v176
    %477 = vmatprep.subr.mxu0 %v173
    %478 = vmatpush1.msra.mxu0 %v172
    %479 = vmatprep.subr.mxu0 %v169
    %480 = vmatpush1.msra.mxu0 %v168
    %481 = vmatprep.subr.mxu0 %v165
    %482 = vmatpush1.msra.mxu0 %v164
    %483 = vmatprep.subr.mxu0 %v161
    %484 = vmatpush1.msra.mxu0 %v160
    %485 = vmatprep.subr.mxu0 %v157
    %486 = vmatpush1.msra.mxu0 %v156
    %487 = vmatprep.subr.mxu0 %v153
    %488 = vmatpush1.msra.mxu0 %v152
    %489 = vmatprep.subr.mxu0 %v149
    %490 = vmatpush1.msra.mxu0 %v148
    %491 = vmatprep.subr.mxu0 0.0
    %492 = vmatpush2.msra.mxu0 0.0
    %493 = vmatprep.subr.mxu0 0.0
    %494 = vmatpush2.msra.mxu0 0.0
    %495 = vmatprep.subr.mxu0 0.0
    %496 = vmatpush2.msra.mxu0 0.0
    %497 = vmatprep.subr.mxu0 0.0
    %498 = vmatpush2.msra.mxu0 0.0
    %499 = vmatprep.subr.mxu0 0.0
    %500 = vmatpush2.msra.mxu0 0.0
    %501 = vmatprep.subr.mxu0 0.0
    %502 = vmatpush2.msra.mxu0 0.0
    %503 = vmatprep.subr.mxu0 0.0
    %504 = vmatpush2.msra.mxu0 0.0
    %505 = vmatprep.subr.mxu0 0.0
    %506 = vmatpush2.msra.mxu0 0.0
    %507 = vmatprep.subr.mxu0 0.0
    %508 = vmatpush2.msra.mxu0 0.0
    %509 = vmatprep.subr.mxu0 0.0
    %510 = vmatpush2.msra.mxu0 0.0
    %511 = vmatprep.subr.mxu0 0.0
    %512 = vmatpush2.msra.mxu0 0.0
    %513 = vmatprep.subr.mxu0 0.0
    %514 = vmatpush2.msra.mxu0 0.0
    %515 = vmatprep.subr.mxu0 0.0
    %516 = vmatpush2.msra.mxu0 0.0
    %517 = vmatprep.subr.mxu0 0.0
    %518 = vmatpush2.msra.mxu0 0.0
    %519 = vmatprep.subr.mxu0 0.0
    %520 = vmatpush2.msra.mxu0 0.0
    %521 = vmatprep.subr.mxu0 0.0
    %522 = vmatpush2.msra.mxu0 0.0
    %523 = vmatprep.mubr.f32.mxu0 0.0
    %524 = vmatmul.mubr.f32.gmra.mxu0 %v386
    %v525 = vpop.f32.mrf.mxu0
    %v526 = vadd.f32 %v380, %v525
    %v527 = vpop.f32.mrf.mxu0
    %v528 = vadd.f32 %v382, %v527
    %529 = vdwg.mxu0
    %v530 = vld [vmem:[%s7] sm:$0xf]
    %v532 = vlaneseq
    %v533 = vshrl.u32 %v532, 7
    %v534 = vsub.s32 0, %v533
    %v535 = vrot.slane %v530, %v534
    %v536 = vlaneseq
    %v537 = vshrl.u32 %v536, 7
    %v538 = vsub.s32 1, %v537
    %v539 = vrot.slane %v530, %v538
    %v540 = vlaneseq
    %v541 = vshrl.u32 %v540, 7
    %v542 = vsub.s32 2, %v541
    %v543 = vrot.slane %v530, %v542
    %v544 = vlaneseq
    %v545 = vshrl.u32 %v544, 7
    %v546 = vsub.s32 3, %v545
    %v547 = vrot.slane %v530, %v546
    %v552 = vadd.f32 %v455, %v535
    %v553 = vadd.f32 %v457, %v539
    %v554 = vadd.f32 %v526, %v543
    %v555 = vadd.f32 %v528, %v547
    %v556 = vxor.u32 %v552, 2147483648
    %v557 = vmul.f32 %v556, 1.442695
    %v558 = vpow.pop %v557
    %v559 = vadd.f32 %v558, 1.0
    %v560 = vrcp.pop %v559
    %v561 = vmul.f32 1.0, %v560
    %v562 = vxor.u32 %v553, 2147483648
    %v563 = vmul.f32 %v562, 1.442695
    %v564 = vpow.pop %v563
    %v565 = vadd.f32 %v564, 1.0
    %v566 = vrcp.pop %v565
    %v567 = vmul.f32 1.0, %v566
    %v568 = vtanh.pop %v554
    %v569 = vxor.u32 %v555, 2147483648
    %v570 = vmul.f32 %v569, 1.442695
    %v571 = vpow.pop %v570
    %v572 = vadd.f32 %v571, 1.0
    %v573 = vrcp.pop %v572
    %v574 = vmul.f32 1.0, %v573
    %v575 = vmul.f32 %v567, %v114
    %v576 = vmul.f32 %v561, %v568
    %v577 = vadd.f32 %v575, %v576
    %v578 = vtanh.pop %v577
    %v579 = vmul.f32 %v574, %v578
    %v580 = vld [vmem:[#allocation10] sm:$0xff]
    %v581 = vld [vmem:[#allocation10 + $0x8] sm:$0xff]
    %v582 = vld [vmem:[#allocation10 + $0x10] sm:$0xff]
    %v583 = vld [vmem:[#allocation10 + $0x18] sm:$0xff]
    %v584 = vld [vmem:[#allocation10 + $0x20] sm:$0xff]
    %v585 = vld [vmem:[#allocation10 + $0x28] sm:$0xff]
    %v586 = vld [vmem:[#allocation10 + $0x30] sm:$0xff]
    %v587 = vld [vmem:[#allocation10 + $0x38] sm:$0xff]
    %v588 = vld [vmem:[#allocation10 + $0x40] sm:$0xff]
    %v589 = vld [vmem:[#allocation10 + $0x48] sm:$0xff]
    %v590 = vld [vmem:[#allocation10 + $0x50] sm:$0xff]
    %v591 = vld [vmem:[#allocation10 + $0x58] sm:$0xff]
    %v592 = vld [vmem:[#allocation10 + $0x60] sm:$0xff]
    %v593 = vld [vmem:[#allocation10 + $0x68] sm:$0xff]
    %v594 = vld [vmem:[#allocation10 + $0x70] sm:$0xff]
    %v595 = vld [vmem:[#allocation10 + $0x78] sm:$0xff]
    %v596 = vld [vmem:[%s9] sm:$0x1]
    %v598 = vlaneseq
    %v599 = vshrl.u32 %v598, 7
    %v600 = vsub.s32 0, %v599
    %v601 = vrot.slane %v596, %v600
    %603 = vmatprep.subr.mxu0 0.0
    %604 = vmatpush1.msra.mxu0 %v595
    %605 = vmatprep.subr.mxu0 0.0
    %606 = vmatpush1.msra.mxu0 %v594
    %607 = vmatprep.subr.mxu0 0.0
    %608 = vmatpush1.msra.mxu0 %v593
    %609 = vmatprep.subr.mxu0 0.0
    %610 = vmatpush1.msra.mxu0 %v592
    %611 = vmatprep.subr.mxu0 0.0
    %612 = vmatpush1.msra.mxu0 %v591
    %613 = vmatprep.subr.mxu0 0.0
    %614 = vmatpush1.msra.mxu0 %v590
    %615 = vmatprep.subr.mxu0 0.0
    %616 = vmatpush1.msra.mxu0 %v589
    %617 = vmatprep.subr.mxu0 0.0
    %618 = vmatpush1.msra.mxu0 %v588
    %619 = vmatprep.subr.mxu0 0.0
    %620 = vmatpush1.msra.mxu0 %v587
    %621 = vmatprep.subr.mxu0 0.0
    %622 = vmatpush1.msra.mxu0 %v586
    %623 = vmatprep.subr.mxu0 0.0
    %624 = vmatpush1.msra.mxu0 %v585
    %625 = vmatprep.subr.mxu0 0.0
    %626 = vmatpush1.msra.mxu0 %v584
    %627 = vmatprep.subr.mxu0 0.0
    %628 = vmatpush1.msra.mxu0 %v583
    %629 = vmatprep.subr.mxu0 0.0
    %630 = vmatpush1.msra.mxu0 %v582
    %631 = vmatprep.subr.mxu0 0.0
    %632 = vmatpush1.msra.mxu0 %v581
    %633 = vmatprep.subr.mxu0 0.0
    %634 = vmatpush1.msra.mxu0 %v580
    %635 = vmatprep.subr.mxu0 0.0
    %636 = vmatpush2.msra.mxu0 0.0
    %637 = vmatprep.subr.mxu0 0.0
    %638 = vmatpush2.msra.mxu0 0.0
    %639 = vmatprep.subr.mxu0 0.0
    %640 = vmatpush2.msra.mxu0 0.0
    %641 = vmatprep.subr.mxu0 0.0
    %642 = vmatpush2.msra.mxu0 0.0
    %643 = vmatprep.subr.mxu0 0.0
    %644 = vmatpush2.msra.mxu0 0.0
    %645 = vmatprep.subr.mxu0 0.0
    %646 = vmatpush2.msra.mxu0 0.0
    %647 = vmatprep.subr.mxu0 0.0
    %648 = vmatpush2.msra.mxu0 0.0
    %649 = vmatprep.subr.mxu0 0.0
    %650 = vmatpush2.msra.mxu0 0.0
    %651 = vmatprep.subr.mxu0 0.0
    %652 = vmatpush2.msra.mxu0 0.0
    %653 = vmatprep.subr.mxu0 0.0
    %654 = vmatpush2.msra.mxu0 0.0
    %655 = vmatprep.subr.mxu0 0.0
    %656 = vmatpush2.msra.mxu0 0.0
    %657 = vmatprep.subr.mxu0 0.0
    %658 = vmatpush2.msra.mxu0 0.0
    %659 = vmatprep.subr.mxu0 0.0
    %660 = vmatpush2.msra.mxu0 0.0
    %661 = vmatprep.subr.mxu0 0.0
    %662 = vmatpush2.msra.mxu0 0.0
    %663 = vmatprep.subr.mxu0 0.0
    %664 = vmatpush2.msra.mxu0 0.0
    %665 = vmatprep.subr.mxu0 0.0
    %666 = vmatpush2.msra.mxu0 0.0
    %667 = vmatprep.mubr.f32.mxu0 0.0
    %668 = vmatmul.mubr.f32.gmra.mxu0 %v579
    %v669 = vpop.f32.mrf.mxu0
    %v670 = vadd.f32 %v601, %v669
    %v671 = vpop.f32.mrf.mxu0
    %672 = vdwg.mxu0
    %673 = vst [vmem:[#allocation11] sm:$0xff] %v670
    %674 = vst [vmem:[#allocation12] sm:$0xff] %v579
    %675 = vst [vmem:[#allocation14] sm:$0xff] %v577
    // Predicated region
    $region66: #{lstm1l_rollout.1} parent=1 // pred_check
      _
    $region67: #{lstm1l_rollout.1} parent=1 // pred_check_branch
      %677 = sbr.rel (0) target = $region69
    $region68: #{lstm1l_rollout.1} parent=1 // pred_region
      %s679 = ssub.s32 128, 128
      %680 = vsyncadd [#allocation4], %s679
      %s682 = sshll.u32 [#allocation11], 4
      %s683 = int_to_ptr.vmem [resolvable:$true] %s682
      %685 = dma.vmem_to_hbm [thread:$0]  %s683, 128, %s10, [#allocation4]
    $region69: #{lstm1l_rollout.1} parent=1 // pred_fallthru
      _
    // Predicated region
    $region70: #{lstm1l_rollout.1} parent=1 // pred_check
      _
    $region71: #{lstm1l_rollout.1} parent=1 // pred_check_branch
      %687 = sbr.rel (0) target = $region73
    $region72: #{lstm1l_rollout.1} parent=1 // pred_region
      %s689 = ssub.s32 128, 128
      %690 = vsyncadd [#allocation13], %s689
      %s692 = sshll.u32 [#allocation12], 4
      %s693 = int_to_ptr.vmem [resolvable:$true] %s692
      %695 = dma.vmem_to_hbm [thread:$0]  %s693, 128, %s11, [#allocation13]
    $region73: #{lstm1l_rollout.1} parent=1 // pred_fallthru
      _
    // Predicated region
    $region74: #{lstm1l_rollout.1} parent=1 // pred_check
      _
    $region75: #{lstm1l_rollout.1} parent=1 // pred_check_branch
      %697 = sbr.rel (0) target = $region77
    $region76: #{lstm1l_rollout.1} parent=1 // pred_region
      %s699 = ssub.s32 128, 128
      %700 = vsyncadd [#allocation13], %s699
      %s702 = sshll.u32 [#allocation14], 4
      %s703 = int_to_ptr.vmem [resolvable:$true] %s702
      %705 = dma.vmem_to_hbm [thread:$0]  %s703, 128, %s12, [#allocation13]
    $region77: #{lstm1l_rollout.1} parent=1 // pred_fallthru
      _
    // Predicated region
    $region78: #{lstm1l_rollout.1} parent=1 // pred_check
      _
    $region79: #{lstm1l_rollout.1} parent=1 // pred_check_branch
      %707 = sbr.rel (0) target = $region81
    $region80: #{lstm1l_rollout.1} parent=1 // pred_region
      %708 = dma.done [#allocation4], 128
    $region81: #{lstm1l_rollout.1} parent=1 // pred_fallthru
      _
    // Predicated region
    $region82: #{lstm1l_rollout.1} parent=1 // pred_check
      _
    $region83: #{lstm1l_rollout.1} parent=1 // pred_check_branch
      %710 = sbr.rel (0) target = $region85
    $region84: #{lstm1l_rollout.1} parent=1 // pred_region
      %711 = dma.done [#allocation13], 128
    $region85: #{lstm1l_rollout.1} parent=1 // pred_fallthru
      _
    // Predicated region
    $region86: #{lstm1l_rollout.1} parent=1 // pred_check
      _
    $region87: #{lstm1l_rollout.1} parent=1 // pred_check_branch
      %713 = sbr.rel (0) target = $region89
    $region88: #{lstm1l_rollout.1} parent=1 // pred_region
      %714 = dma.done [#allocation13], 128
    $region89: #{lstm1l_rollout.1} parent=1 // pred_fallthru
      _
    %715 = vsyncpa [#allocation3], 1
    %716 = vsyncpa [#allocation6], 1
    %717 = vsyncpa [#allocation9], 1
    %718 = vsyncpa [#allocation4], 1
    %719 = vsyncpa [#allocation13], 1

</llo_original>
